<compile_context>
chip_gen: v6e
topology: v6e:2x2x1
jax: 0.10.0
libtpu: 0.0.40
codegen_flags: <defaults>
</compile_context>

<pallas_src>
import jax
import jax.numpy as jnp
from jax.experimental import pallas as pl
from jax.experimental.pallas import tpu as pltpu


# ----------------------------- Pallas kernel --------------------------------

def _upsample_conv_kernel(x_ref, w_ref, g_ref, b_ref, o_ref):
    # x_ref: (Cin, H+2, W+2)   zero-padded input image (one batch element)
    # w_ref: (3*Cout, 3*Cin)   rows: kx-major / co-minor, cols: ky-major / ci-minor
    # g_ref: (3, W+2, 2*W)     horizontal "upsample + shift by kx" selection matrices
    # b_ref: (Cout, 1)         bias
    # o_ref: (Cout, 2*H, 2*W)  output image (NCHW slice), lane axis = 2*W
    hp2 = x_ref.shape[1]
    h_in = hp2 - 2
    cout = o_ref.shape[0]

    def row_pair(a, carry):
        # Padded-input rows that can feed output rows 2a (parity 0) and 2a+1
        # (parity 1).  Nearest-2x upsample means output row 2a+py, vertical tap
        # ky reads input row a + (py + ky - 1)//2, i.e. padded rows below.
        xa = x_ref[:, a, :]          # (Cin, W+2)
        xb = x_ref[:, a + 1, :]      # (Cin, W+2)
        xc = x_ref[:, a + 2, :]      # (Cin, W+2)
        w_all = w_ref[...]           # (3*Cout, 3*Cin)
        bias = b_ref[...]            # (Cout, 1)

        for py, taps in ((0, (xa, xb, xb)), (1, (xb, xb, xc))):
            # x3[ky*Cin + ci, :] = padded input row seen by vertical tap ky.
            x3 = jnp.concatenate(taps, axis=0)                            # (3*Cin, W+2)
            # Channel + vertical mixing for all three horizontal taps at once.
            m = jnp.dot(w_all, x3, preferred_element_type=jnp.float32)    # (3*Cout, W+2)
            # Horizontal nearest-upsample + shift-by-kx + sum, done on the MXU
            # with constant 0/1 selection matrices (keeps output lane-dense).
            y = jnp.dot(m[0:cout, :], g_ref[0],
                        preferred_element_type=jnp.float32)               # (Cout, 2*W)
            y = y + jnp.dot(m[cout:2 * cout, :], g_ref[1],
                            preferred_element_type=jnp.float32)
            y = y + jnp.dot(m[2 * cout:3 * cout, :], g_ref[2],
                            preferred_element_type=jnp.float32)
            y = y + bias
            o_ref[:, 2 * a + py, :] = y.astype(o_ref.dtype)
        return carry

    jax.lax.fori_loop(0, h_in, row_pair, None)


# ------------------------------- Wrapper -------------------------------------

def upsample_forward(x_nchw, weight, bias):
    """
    x_nchw: (N, C, H, W) float32
    weight: (Cout, Cin, 3, 3)  (PyTorch conv layout), Cout == Cin == C
    bias:   (Cout,)
    returns (N, Cout, 2H, 2W) = Conv2d(3x3, s1, p1)(nearest_upsample_2x(x))
    """
    n, cin, h, w = x_nchw.shape
    cout = weight.shape[0]
    ho, wo = 2 * h, 2 * w
    wp2 = w + 2

    # +1 halo zero pad of the *original* input (tiny, input-sized) — the
    # upsampled image itself is never materialized in HBM.
    x_pad = jnp.pad(x_nchw, ((0, 0), (0, 0), (1, 1), (1, 1)))

    # Weight (Cout, Cin, ky, kx) -> (kx, Cout, ky, Cin) -> (3*Cout, 3*Cin).
    # Static, tiny; could be hoisted to module init.
    w_mat = jnp.transpose(weight, (3, 0, 2, 1)).reshape(3 * cout, 3 * cin)

    # Horizontal selection matrices: for tap kx, output column ow reads the
    # upsampled-padded column j = ow + kx, which comes from padded input column
    # gh(j) = 0 (left pad), (j-1)//2 + 1 (interior), W+1 (right pad).
    ow_idx = jnp.arange(wo)
    g_list = []
    for kx in range(3):
        j = ow_idx + kx
        src = jnp.where(j == 0, 0,
                        jnp.where(j == wo + 1, w + 1, (j - 1) // 2 + 1))
        g = (jnp.arange(wp2)[:, None] == src[None, :]).astype(x_nchw.dtype)  # (W+2, 2W)
        g_list.append(g)
    g_all = jnp.stack(g_list, axis=0)          # (3, W+2, 2W)

    bias2d = bias.reshape(cout, 1)

    return pl.pallas_call(
        _upsample_conv_kernel,
        out_shape=jax.ShapeDtypeStruct((n, cout, ho, wo), x_nchw.dtype),
        grid_spec=pltpu.PrefetchScalarGridSpec(
            num_scalar_prefetch=0,
            grid=(n,),                                     # one whole image per step
            in_specs=[
                pl.BlockSpec((None, cin, h + 2, wp2), lambda b: (b, 0, 0, 0)),
                pl.BlockSpec((3 * cout, 3 * cin), lambda b: (0, 0)),        # grid-invariant
                pl.BlockSpec((3, wp2, wo), lambda b: (0, 0, 0)),            # grid-invariant
                pl.BlockSpec((cout, 1), lambda b: (0, 0)),                  # grid-invariant
            ],
            out_specs=pl.BlockSpec((None, cout, ho, wo), lambda b: (b, 0, 0, 0)),
        ),
        compiler_params=pltpu.CompilerParams(
            dimension_semantics=("parallel",),             # batch axis -> megacore / 2 TCs
            vmem_limit_bytes=64 * 1024 * 1024,
        ),
    )(x_pad, w_mat, g_all, bias2d)


# ------------------------------- Main ----------------------------------------

if __name__ == "__main__":
    key = jax.random.PRNGKey(0)
    k_x, k_w, k_b = jax.random.split(key, 3)

    N, C, H, W = 2, 4, 16, 16
    x = jax.random.normal(k_x, (N, C, H, W), dtype=jnp.float32)

    # Deterministic "Kaiming-ish" init for Conv2d(C, C, 3, 3) weights + bias.
    fan_in = C * 3 * 3
    bound = 1.0 / (fan_in ** 0.5)
    weight = jax.random.uniform(k_w, (C, C, 3, 3), jnp.float32, -bound, bound)
    bias = jax.random.uniform(k_b, (C,), jnp.float32, -bound, bound)

    y = upsample_forward(x, weight, bias)
    y = jax.block_until_ready(y)

    # Reference: explicit nearest 2x upsample + XLA conv (3x3, stride 1, pad 1).
    x_up = jnp.repeat(jnp.repeat(x, 2, axis=2), 2, axis=3)
    y_ref = jax.lax.conv_general_dilated(
        x_up, weight,
        window_strides=(1, 1),
        padding=((1, 1), (1, 1)),
        dimension_numbers=("NCHW", "OIHW", "NCHW"),
    ) + bias.reshape(1, C, 1, 1)

    assert y.shape == (N, C, 2 * H, 2 * W), y.shape
    max_err = float(jnp.max(jnp.abs(y - y_ref)))
    assert jnp.allclose(y, y_ref, atol=1e-3, rtol=1e-3), max_err

    print("KERNEL_OK")
</pallas_src>

<mosaic_0001>
module attributes {stable_mosaic.version = 11 : i64} {
  func.func @_upsample_conv_kernel(%arg0: i32, %arg1: memref<1x4x18x18xf32, #tpu.memory_space<vmem>>, %arg2: memref<12x12xf32, #tpu.memory_space<vmem>>, %arg3: memref<3x18x32xf32, #tpu.memory_space<vmem>>, %arg4: memref<4x1xf32, #tpu.memory_space<vmem>>, %arg5: memref<1x4x32x32xf32, #tpu.memory_space<vmem>>) attributes {dimension_semantics = [#tpu.dimension_semantics<parallel>], iteration_bounds = array<i64: 2>, scalar_prefetch = 0 : i64, scratch_operands = 0 : i64, tpu.core_type = #tpu.core_type<tc>, window_params = [{transform_indices = @transform_0, window_bounds = array<i64: 1, 4, 18, 18>}, {pipeline_mode = #tpu.pipeline_mode<synchronous>, transform_indices = @transform_1, window_bounds = array<i64: 12, 12>}, {pipeline_mode = #tpu.pipeline_mode<synchronous>, transform_indices = @transform_2, window_bounds = array<i64: 3, 18, 32>}, {pipeline_mode = #tpu.pipeline_mode<synchronous>, transform_indices = @transform_3, window_bounds = array<i64: 4, 1>}, {transform_indices = @transform_4, window_bounds = array<i64: 1, 4, 32, 32>}]} {
    %c0_i32 = arith.constant 0 : i32
    %c16_i32 = arith.constant 16 : i32
    %0 = arith.addi %c0_i32, %c16_i32 : i32
    %c1_i32 = arith.constant 1 : i32
    scf.for %arg6 = %c0_i32 to %0 step %c1_i32  : i32 {
      %c0 = arith.constant 0 : index
      %c0_1 = arith.constant 0 : index
      %1 = arith.index_cast %arg6 : i32 to index
      %c0_2 = arith.constant 0 : index
      %2 = vector.load %arg1[%c0, %c0_1, %1, %c0_2] : memref<1x4x18x18xf32, #tpu.memory_space<vmem>>, vector<1x4x1x18xf32>
      %3 = vector.shape_cast %2 : vector<1x4x1x18xf32> to vector<4x18xf32>
      %c1_i32_3 = arith.constant 1 : i32
      %4 = arith.addi %arg6, %c1_i32_3 : i32
      %c0_4 = arith.constant 0 : index
      %c0_5 = arith.constant 0 : index
      %5 = arith.index_cast %4 : i32 to index
      %c0_6 = arith.constant 0 : index
      %6 = vector.load %arg1[%c0_4, %c0_5, %5, %c0_6] : memref<1x4x18x18xf32, #tpu.memory_space<vmem>>, vector<1x4x1x18xf32>
      %7 = vector.shape_cast %6 : vector<1x4x1x18xf32> to vector<4x18xf32>
      %c2_i32 = arith.constant 2 : i32
      %8 = arith.addi %arg6, %c2_i32 : i32
      %c0_7 = arith.constant 0 : index
      %c0_8 = arith.constant 0 : index
      %9 = arith.index_cast %8 : i32 to index
      %c0_9 = arith.constant 0 : index
      %10 = vector.load %arg1[%c0_7, %c0_8, %9, %c0_9] : memref<1x4x18x18xf32, #tpu.memory_space<vmem>>, vector<1x4x1x18xf32>
      %11 = vector.shape_cast %10 : vector<1x4x1x18xf32> to vector<4x18xf32>
      %c0_10 = arith.constant 0 : index
      %c0_11 = arith.constant 0 : index
      %12 = vector.load %arg2[%c0_10, %c0_11] : memref<12x12xf32, #tpu.memory_space<vmem>>, vector<12x12xf32>
      %c0_12 = arith.constant 0 : index
      %c0_13 = arith.constant 0 : index
      %13 = vector.load %arg4[%c0_12, %c0_13] : memref<4x1xf32, #tpu.memory_space<vmem>>, vector<4x1xf32>
      %14 = tpu.concatenate %3, %7, %7 in 0 : vector<4x18xf32>, vector<4x18xf32>, vector<4x18xf32> -> vector<12x18xf32>
      %cst = arith.constant dense<0.000000e+00> : vector<12x18xf32>
      %15 = tpu.matmul %12, %14, %cst {dimension_numbers = #tpu.dot_dimension_numbers<[1], [0], [0], [1], [0, 0, 1, 1], [], []>} : vector<12x12xf32>, vector<12x18xf32>, vector<12x18xf32> -> vector<12x18xf32>
      %16 = vector.extract_strided_slice %15 {offsets = [0, 0], sizes = [4, 18], strides = [1, 1]} : vector<12x18xf32> to vector<4x18xf32>
      %c0_14 = arith.constant 0 : index
      %c0_15 = arith.constant 0 : index
      %c0_16 = arith.constant 0 : index
      %17 = vector.load %arg3[%c0_14, %c0_15, %c0_16] : memref<3x18x32xf32, #tpu.memory_space<vmem>>, vector<1x18x32xf32>
      %18 = vector.shape_cast %17 : vector<1x18x32xf32> to vector<18x32xf32>
      %cst_17 = arith.constant dense<0.000000e+00> : vector<4x32xf32>
      %19 = tpu.matmul %16, %18, %cst_17 {dimension_numbers = #tpu.dot_dimension_numbers<[1], [0], [0], [1], [0, 0, 1, 1], [], []>} : vector<4x18xf32>, vector<18x32xf32>, vector<4x32xf32> -> vector<4x32xf32>
      %20 = vector.extract_strided_slice %15 {offsets = [4, 0], sizes = [4, 18], strides = [1, 1]} : vector<12x18xf32> to vector<4x18xf32>
      %c1 = arith.constant 1 : index
      %c0_18 = arith.constant 0 : index
      %c0_19 = arith.constant 0 : index
      %21 = vector.load %arg3[%c1, %c0_18, %c0_19] : memref<3x18x32xf32, #tpu.memory_space<vmem>>, vector<1x18x32xf32>
      %22 = vector.shape_cast %21 : vector<1x18x32xf32> to vector<18x32xf32>
      %cst_20 = arith.constant dense<0.000000e+00> : vector<4x32xf32>
      %23 = tpu.matmul %20, %22, %cst_20 {dimension_numbers = #tpu.dot_dimension_numbers<[1], [0], [0], [1], [0, 0, 1, 1], [], []>} : vector<4x18xf32>, vector<18x32xf32>, vector<4x32xf32> -> vector<4x32xf32>
      %24 = arith.addf %19, %23 : vector<4x32xf32>
      %25 = vector.extract_strided_slice %15 {offsets = [8, 0], sizes = [4, 18], strides = [1, 1]} : vector<12x18xf32> to vector<4x18xf32>
      %c2 = arith.constant 2 : index
      %c0_21 = arith.constant 0 : index
      %c0_22 = arith.constant 0 : index
      %26 = vector.load %arg3[%c2, %c0_21, %c0_22] : memref<3x18x32xf32, #tpu.memory_space<vmem>>, vector<1x18x32xf32>
      %27 = vector.shape_cast %26 : vector<1x18x32xf32> to vector<18x32xf32>
      %cst_23 = arith.constant dense<0.000000e+00> : vector<4x32xf32>
      %28 = tpu.matmul %25, %27, %cst_23 {dimension_numbers = #tpu.dot_dimension_numbers<[1], [0], [0], [1], [0, 0, 1, 1], [], []>} : vector<4x18xf32>, vector<18x32xf32>, vector<4x32xf32> -> vector<4x32xf32>
      %29 = arith.addf %24, %28 : vector<4x32xf32>
      %30 = vector.broadcast %13 : vector<4x1xf32> to vector<4x32xf32>
      %31 = arith.addf %29, %30 : vector<4x32xf32>
      %c2_i32_24 = arith.constant 2 : i32
      %32 = arith.muli %c2_i32_24, %arg6 : i32
      %c0_i32_25 = arith.constant 0 : i32
      %33 = arith.addi %32, %c0_i32_25 : i32
      %c0_26 = arith.constant 0 : index
      %c0_27 = arith.constant 0 : index
      %34 = arith.index_cast %33 : i32 to index
      %c0_28 = arith.constant 0 : index
      %35 = vector.load %arg5[%c0_26, %c0_27, %34, %c0_28] : memref<1x4x32x32xf32, #tpu.memory_space<vmem>>, vector<1x4x1x32xf32>
      %36 = vector.shape_cast %35 : vector<1x4x1x32xf32> to vector<4x32xf32>
      %37 = vector.shape_cast %31 : vector<4x32xf32> to vector<1x4x1x32xf32>
      tpu.vector_store %arg5[%c0_26, %c0_27, %34, %c0_28], %37 {strides = array<i32>} : memref<1x4x32x32xf32, #tpu.memory_space<vmem>>, vector<1x4x1x32xf32>,
      %38 = tpu.concatenate %7, %7, %11 in 0 : vector<4x18xf32>, vector<4x18xf32>, vector<4x18xf32> -> vector<12x18xf32>
      %cst_29 = arith.constant dense<0.000000e+00> : vector<12x18xf32>
      %39 = tpu.matmul %12, %38, %cst_29 {dimension_numbers = #tpu.dot_dimension_numbers<[1], [0], [0], [1], [0, 0, 1, 1], [], []>} : vector<12x12xf32>, vector<12x18xf32>, vector<12x18xf32> -> vector<12x18xf32>
      %40 = vector.extract_strided_slice %39 {offsets = [0, 0], sizes = [4, 18], strides = [1, 1]} : vector<12x18xf32> to vector<4x18xf32>
      %c0_30 = arith.constant 0 : index
      %c0_31 = arith.constant 0 : index
      %c0_32 = arith.constant 0 : index
      %41 = vector.load %arg3[%c0_30, %c0_31, %c0_32] : memref<3x18x32xf32, #tpu.memory_space<vmem>>, vector<1x18x32xf32>
      %42 = vector.shape_cast %41 : vector<1x18x32xf32> to vector<18x32xf32>
      %cst_33 = arith.constant dense<0.000000e+00> : vector<4x32xf32>
      %43 = tpu.matmul %40, %42, %cst_33 {dimension_numbers = #tpu.dot_dimension_numbers<[1], [0], [0], [1], [0, 0, 1, 1], [], []>} : vector<4x18xf32>, vector<18x32xf32>, vector<4x32xf32> -> vector<4x32xf32>
      %44 = vector.extract_strided_slice %39 {offsets = [4, 0], sizes = [4, 18], strides = [1, 1]} : vector<12x18xf32> to vector<4x18xf32>
      %c1_34 = arith.constant 1 : index
      %c0_35 = arith.constant 0 : index
      %c0_36 = arith.constant 0 : index
      %45 = vector.load %arg3[%c1_34, %c0_35, %c0_36] : memref<3x18x32xf32, #tpu.memory_space<vmem>>, vector<1x18x32xf32>
      %46 = vector.shape_cast %45 : vector<1x18x32xf32> to vector<18x32xf32>
      %cst_37 = arith.constant dense<0.000000e+00> : vector<4x32xf32>
      %47 = tpu.matmul %44, %46, %cst_37 {dimension_numbers = #tpu.dot_dimension_numbers<[1], [0], [0], [1], [0, 0, 1, 1], [], []>} : vector<4x18xf32>, vector<18x32xf32>, vector<4x32xf32> -> vector<4x32xf32>
      %48 = arith.addf %43, %47 : vector<4x32xf32>
      %49 = vector.extract_strided_slice %39 {offsets = [8, 0], sizes = [4, 18], strides = [1, 1]} : vector<12x18xf32> to vector<4x18xf32>
      %c2_38 = arith.constant 2 : index
      %c0_39 = arith.constant 0 : index
      %c0_40 = arith.constant 0 : index
      %50 = vector.load %arg3[%c2_38, %c0_39, %c0_40] : memref<3x18x32xf32, #tpu.memory_space<vmem>>, vector<1x18x32xf32>
      %51 = vector.shape_cast %50 : vector<1x18x32xf32> to vector<18x32xf32>
      %cst_41 = arith.constant dense<0.000000e+00> : vector<4x32xf32>
      %52 = tpu.matmul %49, %51, %cst_41 {dimension_numbers = #tpu.dot_dimension_numbers<[1], [0], [0], [1], [0, 0, 1, 1], [], []>} : vector<4x18xf32>, vector<18x32xf32>, vector<4x32xf32> -> vector<4x32xf32>
      %53 = arith.addf %48, %52 : vector<4x32xf32>
      %54 = vector.broadcast %13 : vector<4x1xf32> to vector<4x32xf32>
      %55 = arith.addf %53, %54 : vector<4x32xf32>
      %c2_i32_42 = arith.constant 2 : i32
      %56 = arith.muli %c2_i32_42, %arg6 : i32
      %c1_i32_43 = arith.constant 1 : i32
      %57 = arith.addi %56, %c1_i32_43 : i32
      %c0_44 = arith.constant 0 : index
      %c0_45 = arith.constant 0 : index
      %58 = arith.index_cast %57 : i32 to index
      %c0_46 = arith.constant 0 : index
      %59 = vector.load %arg5[%c0_44, %c0_45, %58, %c0_46] : memref<1x4x32x32xf32, #tpu.memory_space<vmem>>, vector<1x4x1x32xf32>
      %60 = vector.shape_cast %59 : vector<1x4x1x32xf32> to vector<4x32xf32>
      %61 = vector.shape_cast %55 : vector<4x32xf32> to vector<1x4x1x32xf32>
      tpu.vector_store %arg5[%c0_44, %c0_45, %58, %c0_46], %61 {strides = array<i32>} : memref<1x4x32x32xf32, #tpu.memory_space<vmem>>, vector<1x4x1x32xf32>,
    }
    %c16_i32_0 = arith.constant 16 : i32
    return
  }
  func.func @transform_0(%arg0: i32) -> (i32, i32, i32, i32) {
    %c0_i32 = arith.constant 0 : i32
    %c0_i32_0 = arith.constant 0 : i32
    %c0_i32_1 = arith.constant 0 : i32
    %c0_i32_2 = arith.constant 0 : i32
    return %arg0, %c0_i32, %c0_i32_0, %c0_i32_1 : i32, i32, i32, i32
  }
  func.func @transform_1(%arg0: i32) -> (i32, i32) {
    %c0_i32 = arith.constant 0 : i32
    %c0_i32_0 = arith.constant 0 : i32
    %c0_i32_1 = arith.constant 0 : i32
    return %c0_i32, %c0_i32_0 : i32, i32
  }
  func.func @transform_2(%arg0: i32) -> (i32, i32, i32) {
    %c0_i32 = arith.constant 0 : i32
    %c0_i32_0 = arith.constant 0 : i32
    %c0_i32_1 = arith.constant 0 : i32
    %c0_i32_2 = arith.constant 0 : i32
    return %c0_i32, %c0_i32_0, %c0_i32_1 : i32, i32, i32
  }
  func.func @transform_3(%arg0: i32) -> (i32, i32) {
    %c0_i32 = arith.constant 0 : i32
    %c0_i32_0 = arith.constant 0 : i32
    %c0_i32_1 = arith.constant 0 : i32
    return %c0_i32, %c0_i32_0 : i32, i32
  }
  func.func @transform_4(%arg0: i32) -> (i32, i32, i32, i32) {
    %c0_i32 = arith.constant 0 : i32
    %c0_i32_0 = arith.constant 0 : i32
    %c0_i32_1 = arith.constant 0 : i32
    %c0_i32_2 = arith.constant 0 : i32
    return %arg0, %c0_i32, %c0_i32_0, %c0_i32_1 : i32, i32, i32, i32
  }
}

</mosaic_0001>

<llo_original>
// kernel: tpu_custom_call.1
$region0: #{tpu_custom_call.1}
  #allocation0 [shape = 'u32[]', space=smem, size = 0x4, offset = 0x4, fixed_abs, tag = 'smem constant byte address 0x4 - core index']
  #allocation1 [shape = 'u32[144,128]{1,0:T(1,128)}', space=vmem, size = 0x12000, scoped, tag = 'internal scratch']
  %s0 = inlined_call_operand.vmem [shape: f32[2,4,18,18], index: 0, kind: input, shape index: {}]
  %s1 = inlined_call_operand.vmem [shape: f32[12,12], index: 1, kind: input, shape index: {}]
  %s2 = inlined_call_operand.vmem [shape: f32[3,18,32], index: 2, kind: input, shape index: {}]
  %s3 = inlined_call_operand.vmem [shape: f32[4,1], index: 3, kind: input, shape index: {}]
  %s4 = inlined_call_operand.hbm [shape: f32[2,4,32,32], index: 4, kind: output, shape index: {}]
  %s5 = sld [smem:[#allocation0]]
  $region56: #{tpu_custom_call.1} parent=0
    _
  %s7 = ssub.s32 1, %s5
  %s8 = scalar_select 0, %s7, %s5
  $region1: #{tpu_custom_call.1} parent=0
    #allocation2 [shape = 'u8[131072]{0}', space=vmem, size = 0x20000, scoped, tag = 'output window, operand 0']
    #allocation3 [shape = 's32[2]{0}', space=sflag, size = 0x8, scoped, tag = 'scoped memory for tpu_custom_call.1']
    %9 = vsyncpa [#allocation3], 0
    %s10 = scalar_lea.sflag [#allocation3], 1
    %11 = vsyncpa %s10, 0
    loop: start=0, step=1, limit=4
    $region2: #{tpu_custom_call.1} parent=1 // loop_pre_header
      _
    $region3: #{tpu_custom_call.1} parent=1 // loop_header
      %s13 = sphi 0, %s17
      %p14 = scmp.ge.s32.totalorder %s13, 4
      %s23 = sphi 0, %s25
      %s26 = sphi 0, %s23
      %s27 = sphi 0, %s26
      %s43 = sphi 0, %s27
      %s47 = sphi 0, %s47
      %s49 = sphi 0, %s47
      %s50 = sphi 0, %s49
      %s64 = sphi 0, %s50
      %s68 = sphi 0, %s68
      %s70 = sphi 0, %s68
      %s71 = sphi 0, %s70
      %s85 = sphi 0, %s71
      %s89 = sphi 0, %s89
      %s91 = sphi 0, %s89
      %s92 = sphi 0, %s91
      %s106 = sphi 0, %s92
      %s112 = sphi 0, %s114
      %s115 = sphi 0, %s112
      %s116 = sphi 0, %s115
      %s132 = sphi 0, %s116
    $region4: #{tpu_custom_call.1} parent=1 // loop_header_branch
      %16 = sbr.rel (%p14) target = $region8
    $region5: #{tpu_custom_call.1} parent=1 // loop_body
      %s18 = ssub.s32 %s13, 1
      %s19 = ssub.s32 %s13, 2
      %s20 = sadd.s32 %s13, 1
      %s21 = ssub.s32 %s13, %s20
      %p22 = scmp.eq.s32.totalorder %s21, 0
      %s24 = sadd.s32 %s23, 1
      %s25 = scalar_select %p22, %s23, %s24
      %p28 = pneg %p22
      %p29 = scmp.eq.s32.totalorder %s13, 1
      %p30 = por %p28, %p29
      %p31 = scmp.ne.s32.totalorder %s23, %s26
      %p32 = scmp.eq.s32.totalorder %s13, 0
      %p33 = por %p31, %p32
      %p34 = scmp.ne.s32.totalorder %s23, %s26
      %p35 = scmp.eq.s32.totalorder %s18, 1
      %p36 = por %p34, %p35
      %p37 = scmp.ne.s32.totalorder %s26, %s27
      %p38 = scmp.eq.s32.totalorder %s18, 0
      %p39 = por %p37, %p38
      %p40 = scmp.ne.s32.totalorder %s26, %s27
      %p41 = scmp.eq.s32.totalorder %s19, 1
      %p42 = por %p40, %p41
      %p44 = scmp.ne.s32.totalorder %s27, %s43
      %p45 = scmp.eq.s32.totalorder %s19, 0
      %p46 = por %p44, %p45
      %s48 = sadd.s32 %s47, 1
      %p51 = scmp.eq.s32.totalorder %s13, 1
      %p52 = scmp.ne.s32.totalorder %s47, %s49
      %p53 = scmp.eq.s32.totalorder %s13, 0
      %p54 = por %p52, %p53
      %p55 = scmp.ne.s32.totalorder %s47, %s49
      %p56 = scmp.eq.s32.totalorder %s18, 1
      %p57 = por %p55, %p56
      %p58 = scmp.ne.s32.totalorder %s49, %s50
      %p59 = scmp.eq.s32.totalorder %s18, 0
      %p60 = por %p58, %p59
      %p61 = scmp.ne.s32.totalorder %s49, %s50
      %p62 = scmp.eq.s32.totalorder %s19, 1
      %p63 = por %p61, %p62
      %p65 = scmp.ne.s32.totalorder %s50, %s64
      %p66 = scmp.eq.s32.totalorder %s19, 0
      %p67 = por %p65, %p66
      %s69 = sadd.s32 %s68, 1
      %p72 = scmp.eq.s32.totalorder %s13, 1
      %p73 = scmp.ne.s32.totalorder %s68, %s70
      %p74 = scmp.eq.s32.totalorder %s13, 0
      %p75 = por %p73, %p74
      %p76 = scmp.ne.s32.totalorder %s68, %s70
      %p77 = scmp.eq.s32.totalorder %s18, 1
      %p78 = por %p76, %p77
      %p79 = scmp.ne.s32.totalorder %s70, %s71
      %p80 = scmp.eq.s32.totalorder %s18, 0
      %p81 = por %p79, %p80
      %p82 = scmp.ne.s32.totalorder %s70, %s71
      %p83 = scmp.eq.s32.totalorder %s19, 1
      %p84 = por %p82, %p83
      %p86 = scmp.ne.s32.totalorder %s71, %s85
      %p87 = scmp.eq.s32.totalorder %s19, 0
      %p88 = por %p86, %p87
      %s90 = sadd.s32 %s89, 1
      %p93 = scmp.eq.s32.totalorder %s13, 1
      %p94 = scmp.ne.s32.totalorder %s89, %s91
      %p95 = scmp.eq.s32.totalorder %s13, 0
      %p96 = por %p94, %p95
      %p97 = scmp.ne.s32.totalorder %s89, %s91
      %p98 = scmp.eq.s32.totalorder %s18, 1
      %p99 = por %p97, %p98
      %p100 = scmp.ne.s32.totalorder %s91, %s92
      %p101 = scmp.eq.s32.totalorder %s18, 0
      %p102 = por %p100, %p101
      %p103 = scmp.ne.s32.totalorder %s91, %s92
      %p104 = scmp.eq.s32.totalorder %s19, 1
      %p105 = por %p103, %p104
      %p107 = scmp.ne.s32.totalorder %s92, %s106
      %p108 = scmp.eq.s32.totalorder %s19, 0
      %p109 = por %p107, %p108
      %s110 = ssub.s32 %s13, %s20
      %p111 = scmp.eq.s32.totalorder %s110, 0
      %s113 = sadd.s32 %s112, 1
      %s114 = scalar_select %p111, %s112, %s113
      %p117 = pneg %p111
      %p118 = scmp.eq.s32.totalorder %s13, 1
      %p119 = por %p117, %p118
      %p120 = scmp.ne.s32.totalorder %s112, %s115
      %p121 = scmp.eq.s32.totalorder %s13, 0
      %p122 = por %p120, %p121
      %p123 = scmp.ne.s32.totalorder %s112, %s115
      %p124 = scmp.eq.s32.totalorder %s18, 1
      %p125 = por %p123, %p124
      %p126 = scmp.ne.s32.totalorder %s115, %s116
      %p127 = scmp.eq.s32.totalorder %s18, 0
      %p128 = por %p126, %p127
      %p129 = scmp.ne.s32.totalorder %s115, %s116
      %p130 = scmp.eq.s32.totalorder %s19, 1
      %p131 = por %p129, %p130
      %p133 = scmp.ne.s32.totalorder %s116, %s132
      %p134 = scmp.eq.s32.totalorder %s19, 0
      %p135 = por %p133, %p134
      %p136 = scmp.le.s32.totalorder 1, %s13
      %p137 = scmp.lt.s32.totalorder %s13, 3
      %p138 = pnand %p136, %p137
      %p139 = pneg %p138
      // Predicated region
      $region9: #{tpu_custom_call.1} parent=5 // pred_check
        _
      $region10: #{tpu_custom_call.1} parent=5 // pred_check_branch
        %141 = sbr.rel (%p138) target = $region12
      $region11: #{tpu_custom_call.1} parent=5 // pred_region
        %s142 = ssub.s32 %s13, 1
        // Predicated region
        $region13: #{tpu_custom_call.1} parent=11 // pred_check
          %p143 = pneg %p60
        $region14: #{tpu_custom_call.1} parent=11 // pred_check_branch
          %145 = sbr.rel (%p143) target = $region16
        $region15: #{tpu_custom_call.1} parent=11 // pred_region
          _
        $region16: #{tpu_custom_call.1} parent=11 // pred_fallthru
          _
        // Predicated region
        $region17: #{tpu_custom_call.1} parent=11 // pred_check
          %p146 = pneg %p81
        $region18: #{tpu_custom_call.1} parent=11 // pred_check_branch
          %148 = sbr.rel (%p146) target = $region20
        $region19: #{tpu_custom_call.1} parent=11 // pred_region
          _
        $region20: #{tpu_custom_call.1} parent=11 // pred_fallthru
          _
        // Predicated region
        $region21: #{tpu_custom_call.1} parent=11 // pred_check
          %p149 = pneg %p102
        $region22: #{tpu_custom_call.1} parent=11 // pred_check_branch
          %151 = sbr.rel (%p149) target = $region24
        $region23: #{tpu_custom_call.1} parent=11 // pred_region
          _
        $region24: #{tpu_custom_call.1} parent=11 // pred_fallthru
          _
      $region12: #{tpu_custom_call.1} parent=5 // pred_fallthru
        _
      %p152 = scmp.lt.s32.totalorder %s13, 2
      // Predicated region
      $region25: #{tpu_custom_call.1} parent=5 // pred_check
        %p153 = pneg %p152
      $region26: #{tpu_custom_call.1} parent=5 // pred_check_branch
        %155 = sbr.rel (%p153) target = $region28
      $region27: #{tpu_custom_call.1} parent=5 // pred_region
        // Predicated region
        $region29: #{tpu_custom_call.1} parent=27 // pred_check
          %p156 = pneg %p33
        $region30: #{tpu_custom_call.1} parent=27 // pred_check_branch
          %158 = sbr.rel (%p156) target = $region32
        $region31: #{tpu_custom_call.1} parent=27 // pred_region
          %p159 = scmp.lt.s32.totalorder %s13, 1
          %s160 = scalar_select %p159, %s13, 1
          %s161 = smul.addr %s160, 12
          %s162 = smul.addr %s161, 8
          %s163 = scalar_lea.vmem %s0, %s162
        $region32: #{tpu_custom_call.1} parent=27 // pred_fallthru
          _
      $region28: #{tpu_custom_call.1} parent=5 // pred_fallthru
        _
      %p164 = scmp.le.s32.totalorder 1, %s13
      %p165 = scmp.lt.s32.totalorder %s13, 3
      %p166 = pnand %p164, %p165
      %p167 = pneg %p166
      // Predicated region
      $region33: #{tpu_custom_call.1} parent=5 // pred_check
        _
      $region34: #{tpu_custom_call.1} parent=5 // pred_check_branch
        %169 = sbr.rel (%p166) target = $region36
      $region35: #{tpu_custom_call.1} parent=5 // pred_region
        %s170 = ssub.s32 %s13, 1
        %p171 = scmp.lt.s32.totalorder %s18, 1
        %s172 = scalar_select %p171, %s18, 1
        %s173 = smul.addr %s172, 12
        %s174 = smul.addr %s173, 8
        %s175 = scalar_lea.vmem %s0, %s174
        %p176 = pneg %p39
        %p177 = pneg %p36
        %p178 = pneg %p60
        %p179 = pneg %p57
        %p180 = pneg %p81
        %p181 = pneg %p78
        %p182 = pneg %p102
        %p183 = pneg %p99
        %p184 = pneg %p128
        %p185 = pneg %p125
        %s186 = sand.u32 %s115, 1
        %s187 = scalar_lea.sflag [#allocation3], %s186
        %s188 = sand.u32 %s115, 1
        %s189 = smul.addr %s188, 128
        %s190 = scalar_lea.vmem [#allocation2], %s189
        %p191 = scmp.lt.s32.totalorder %s18, 1
        %s192 = scalar_select %p191, %s18, 1
        %s193 = smul.addr %s192, 12
        %s194 = smul.addr %s193, 8
        %s195 = scalar_lea.vmem %s0, %s194
        loop: start=0, step=1, limit=16
        $region37: #{tpu_custom_call.1} parent=35 // loop_pre_header
          _
        $region38: #{tpu_custom_call.1} parent=35 // loop_header
          %s197 = sphi 0, %s201
          %p198 = scmp.ge.s32.totalorder %s197, 16
        $region39: #{tpu_custom_call.1} parent=35 // loop_header_branch
          %200 = sbr.rel (%p198) target = $region43
        $region40: #{tpu_custom_call.1} parent=35 // loop_body
          %s202 = scalar_lea.vmem %s195, %s197
          %v203 = vld [vmem:[%s202] sm:$0x1]
          %v204 = vld [vmem:[%s202 + $0x18] sm:$0x1]
          %v205 = vld [vmem:[%s202 + $0x30] sm:$0x1]
          %v206 = vld [vmem:[%s202 + $0x48] sm:$0x1]
          %s207 = sadd.s32 %s197, 1
          %s208 = scalar_lea.vmem %s195, %s207
          %v209 = vld [vmem:[%s208] sm:$0x1]
          %v210 = vld [vmem:[%s208 + $0x18] sm:$0x1]
          %v211 = vld [vmem:[%s208 + $0x30] sm:$0x1]
          %v212 = vld [vmem:[%s208 + $0x48] sm:$0x1]
          %s213 = sadd.s32 %s197, 2
          %s214 = scalar_lea.vmem %s195, %s213
          %v215 = vld [vmem:[%s214] sm:$0x1]
          %v216 = vld [vmem:[%s214 + $0x18] sm:$0x1]
          %v217 = vld [vmem:[%s214 + $0x30] sm:$0x1]
          %v218 = vld [vmem:[%s214 + $0x48] sm:$0x1]
          %v219 = vld [vmem:[%s1] sm:$0xff]
          %v220 = vld [vmem:[%s1 + $0x8] sm:$0xf]
          %v221 = vld [vmem:[%s3] sm:$0xf]
          %v226 = vrot.slane %v204, 7
          %vm227 = vcmask 1041409
          %v228 = vsel %vm227, %v226, %v203
          %v229 = vrot.slane %v205, 6
          %vm230 = vcmask 1042434
          %v231 = vsel %vm230, %v229, %v228
          %v232 = vrot.slane %v206, 5
          %vm233 = vcmask 1043459
          %v234 = vsel %vm233, %v232, %v231
          %v240 = vrot.slane %v209, 4
          %v241 = vrot.slane %v210, 3
          %vm242 = vcmask 1045509
          %v243 = vsel %vm242, %v241, %v240
          %v244 = vrot.slane %v211, 2
          %vm245 = vcmask 1046534
          %v246 = vsel %vm245, %v244, %v243
          %v247 = vrot.slane %v212, 1
          %vm248 = vcmask 1047559
          %v249 = vsel %vm248, %v247, %v246
          %v251 = vrot.slane %v210, 7
          %v252 = vsel %vm227, %v251, %v209
          %v253 = vrot.slane %v211, 6
          %v254 = vsel %vm230, %v253, %v252
          %v255 = vrot.slane %v212, 5
          %v256 = vsel %vm233, %v255, %v254
          %vm257 = vcmask 1043456
          %v258 = vsel %vm257, %v234, %v249
          %vm259 = vcmask 97280
          %v261 = vsel %vm259, %v219, 0
          %v264 = vsel %vm259, %v220, 0
          %v266 = vsel %vm257, %v256, 0
          %268 = vmatprep.subr.mxu0 0.0
          %269 = vmatpush1.msra.mxu0 0.0
          %270 = vmatprep.subr.mxu0 0.0
          %271 = vmatpush1.msra.mxu0 0.0
          %272 = vmatprep.subr.mxu0 0.0
          %273 = vmatpush1.msra.mxu0 0.0
          %274 = vmatprep.subr.mxu0 0.0
          %275 = vmatpush1.msra.mxu0 0.0
          %276 = vmatprep.subr.mxu0 0.0
          %277 = vmatpush1.msra.mxu0 0.0
          %278 = vmatprep.subr.mxu0 0.0
          %279 = vmatpush1.msra.mxu0 0.0
          %280 = vmatprep.subr.mxu0 0.0
          %281 = vmatpush1.msra.mxu0 0.0
          %282 = vmatprep.subr.mxu0 0.0
          %283 = vmatpush1.msra.mxu0 0.0
          %284 = vmatprep.subr.mxu0 0.0
          %285 = vmatpush1.msra.mxu0 0.0
          %286 = vmatprep.subr.mxu0 0.0
          %287 = vmatpush1.msra.mxu0 0.0
          %288 = vmatprep.subr.mxu0 0.0
          %289 = vmatpush1.msra.mxu0 0.0
          %290 = vmatprep.subr.mxu0 0.0
          %291 = vmatpush1.msra.mxu0 0.0
          %292 = vmatprep.subr.mxu0 0.0
          %293 = vmatpush1.msra.mxu0 0.0
          %294 = vmatprep.subr.mxu0 0.0
          %295 = vmatpush1.msra.mxu0 0.0
          %296 = vmatprep.subr.mxu0 0.0
          %297 = vmatpush1.msra.mxu0 %v266
          %298 = vmatprep.subr.mxu0 0.0
          %299 = vmatpush1.msra.mxu0 %v258
          %300 = vmatprep.subr.mxu0 0.0
          %301 = vmatpush2.msra.mxu0 0.0
          %302 = vmatprep.subr.mxu0 0.0
          %303 = vmatpush2.msra.mxu0 0.0
          %304 = vmatprep.subr.mxu0 0.0
          %305 = vmatpush2.msra.mxu0 0.0
          %306 = vmatprep.subr.mxu0 0.0
          %307 = vmatpush2.msra.mxu0 0.0
          %308 = vmatprep.subr.mxu0 0.0
          %309 = vmatpush2.msra.mxu0 0.0
          %310 = vmatprep.subr.mxu0 0.0
          %311 = vmatpush2.msra.mxu0 0.0
          %312 = vmatprep.subr.mxu0 0.0
          %313 = vmatpush2.msra.mxu0 0.0
          %314 = vmatprep.subr.mxu0 0.0
          %315 = vmatpush2.msra.mxu0 0.0
          %316 = vmatprep.subr.mxu0 0.0
          %317 = vmatpush2.msra.mxu0 0.0
          %318 = vmatprep.subr.mxu0 0.0
          %319 = vmatpush2.msra.mxu0 0.0
          %320 = vmatprep.subr.mxu0 0.0
          %321 = vmatpush2.msra.mxu0 0.0
          %322 = vmatprep.subr.mxu0 0.0
          %323 = vmatpush2.msra.mxu0 0.0
          %324 = vmatprep.subr.mxu0 0.0
          %325 = vmatpush2.msra.mxu0 0.0
          %326 = vmatprep.subr.mxu0 0.0
          %327 = vmatpush2.msra.mxu0 0.0
          %328 = vmatprep.subr.mxu0 0.0
          %329 = vmatpush2.msra.mxu0 0.0
          %330 = vmatprep.subr.mxu0 0.0
          %331 = vmatpush2.msra.mxu0 0.0
          %332 = vmatprep.mubr.f32.mxu0 0.0
          %333 = vmatmul.mubr.f32.gmra.mxu0 %v261
          %v334 = vpop.f32.mrf.mxu0
          %v335 = vadd.f32 0.0, %v334
          %v336 = vpop.f32.mrf.mxu0
          %337 = vmatprep.mubr.f32.mxu0 0.0
          %338 = vmatmul.mubr.f32.gmra.mxu0 %v264
          %v339 = vpop.f32.mrf.mxu0
          %v340 = vadd.f32 0.0, %v339
          %v341 = vpop.f32.mrf.mxu0
          %342 = vdwg.mxu0
          %v343 = vld [vmem:[%s2] sm:$0xff]
          %v344 = vld [vmem:[%s2 + $0x8] sm:$0xff]
          %v345 = vld [vmem:[%s2 + $0x10] sm:$0x3]
          %s346 = scalar_lea.vmem %s2, 24
          %v347 = vld [vmem:[%s346] sm:$0xff]
          %v348 = vld [vmem:[%s346 + $0x8] sm:$0xff]
          %v349 = vld [vmem:[%s346 + $0x10] sm:$0x3]
          %v351 = vrot.slane %v335, 4
          %vm352 = vcmask 146432
          %v353 = vsel %vm352, %v351, 0
          %vm355 = vcmask 1041408
          %v357 = vsel %vm355, %v349, 0
          %359 = vmatprep.subr.mxu0 0.0
          %360 = vmatpush1.msra.mxu0 0.0
          %361 = vmatprep.subr.mxu0 0.0
          %362 = vmatpush1.msra.mxu0 0.0
          %363 = vmatprep.subr.mxu0 0.0
          %364 = vmatpush1.msra.mxu0 0.0
          %365 = vmatprep.subr.mxu0 0.0
          %366 = vmatpush1.msra.mxu0 0.0
          %367 = vmatprep.subr.mxu0 0.0
          %368 = vmatpush1.msra.mxu0 0.0
          %369 = vmatprep.subr.mxu0 0.0
          %370 = vmatpush1.msra.mxu0 0.0
          %371 = vmatprep.subr.mxu0 0.0
          %372 = vmatpush1.msra.mxu0 0.0
          %373 = vmatprep.subr.mxu0 0.0
          %374 = vmatpush1.msra.mxu0 0.0
          %375 = vmatprep.subr.mxu0 0.0
          %376 = vmatpush1.msra.mxu0 0.0
          %377 = vmatprep.subr.mxu0 0.0
          %378 = vmatpush1.msra.mxu0 0.0
          %379 = vmatprep.subr.mxu0 0.0
          %380 = vmatpush1.msra.mxu0 0.0
          %381 = vmatprep.subr.mxu0 0.0
          %382 = vmatpush1.msra.mxu0 0.0
          %383 = vmatprep.subr.mxu0 0.0
          %384 = vmatpush1.msra.mxu0 0.0
          %385 = vmatprep.subr.mxu0 0.0
          %386 = vmatpush1.msra.mxu0 %v357
          %387 = vmatprep.subr.mxu0 0.0
          %388 = vmatpush1.msra.mxu0 %v348
          %389 = vmatprep.subr.mxu0 0.0
          %390 = vmatpush1.msra.mxu0 %v347
          %391 = vmatprep.subr.mxu0 0.0
          %392 = vmatpush2.msra.mxu0 0.0
          %393 = vmatprep.subr.mxu0 0.0
          %394 = vmatpush2.msra.mxu0 0.0
          %395 = vmatprep.subr.mxu0 0.0
          %396 = vmatpush2.msra.mxu0 0.0
          %397 = vmatprep.subr.mxu0 0.0
          %398 = vmatpush2.msra.mxu0 0.0
          %399 = vmatprep.subr.mxu0 0.0
          %400 = vmatpush2.msra.mxu0 0.0
          %401 = vmatprep.subr.mxu0 0.0
          %402 = vmatpush2.msra.mxu0 0.0
          %403 = vmatprep.subr.mxu0 0.0
          %404 = vmatpush2.msra.mxu0 0.0
          %405 = vmatprep.subr.mxu0 0.0
          %406 = vmatpush2.msra.mxu0 0.0
          %407 = vmatprep.subr.mxu0 0.0
          %408 = vmatpush2.msra.mxu0 0.0
          %409 = vmatprep.subr.mxu0 0.0
          %410 = vmatpush2.msra.mxu0 0.0
          %411 = vmatprep.subr.mxu0 0.0
          %412 = vmatpush2.msra.mxu0 0.0
          %413 = vmatprep.subr.mxu0 0.0
          %414 = vmatpush2.msra.mxu0 0.0
          %415 = vmatprep.subr.mxu0 0.0
          %416 = vmatpush2.msra.mxu0 0.0
          %417 = vmatprep.subr.mxu0 0.0
          %418 = vmatpush2.msra.mxu0 0.0
          %419 = vmatprep.subr.mxu0 0.0
          %420 = vmatpush2.msra.mxu0 0.0
          %421 = vmatprep.subr.mxu0 0.0
          %422 = vmatpush2.msra.mxu0 0.0
          %423 = vmatprep.mubr.f32.mxu0 0.0
          %424 = vmatmul.mubr.f32.gmra.mxu0 %v353
          %v425 = vpop.f32.mrf.mxu0
          %v426 = vadd.f32 0.0, %v425
          %v427 = vpop.f32.mrf.mxu0
          %428 = vdwg.mxu0
          %v429 = vsel %vm352, %v335, 0
          %v432 = vsel %vm355, %v345, 0
          %434 = vmatprep.subr.mxu0 0.0
          %435 = vmatpush1.msra.mxu0 0.0
          %436 = vmatprep.subr.mxu0 0.0
          %437 = vmatpush1.msra.mxu0 0.0
          %438 = vmatprep.subr.mxu0 0.0
          %439 = vmatpush1.msra.mxu0 0.0
          %440 = vmatprep.subr.mxu0 0.0
          %441 = vmatpush1.msra.mxu0 0.0
          %442 = vmatprep.subr.mxu0 0.0
          %443 = vmatpush1.msra.mxu0 0.0
          %444 = vmatprep.subr.mxu0 0.0
          %445 = vmatpush1.msra.mxu0 0.0
          %446 = vmatprep.subr.mxu0 0.0
          %447 = vmatpush1.msra.mxu0 0.0
          %448 = vmatprep.subr.mxu0 0.0
          %449 = vmatpush1.msra.mxu0 0.0
          %450 = vmatprep.subr.mxu0 0.0
          %451 = vmatpush1.msra.mxu0 0.0
          %452 = vmatprep.subr.mxu0 0.0
          %453 = vmatpush1.msra.mxu0 0.0
          %454 = vmatprep.subr.mxu0 0.0
          %455 = vmatpush1.msra.mxu0 0.0
          %456 = vmatprep.subr.mxu0 0.0
          %457 = vmatpush1.msra.mxu0 0.0
          %458 = vmatprep.subr.mxu0 0.0
          %459 = vmatpush1.msra.mxu0 0.0
          %460 = vmatprep.subr.mxu0 0.0
          %461 = vmatpush1.msra.mxu0 %v432
          %462 = vmatprep.subr.mxu0 0.0
          %463 = vmatpush1.msra.mxu0 %v344
          %464 = vmatprep.subr.mxu0 0.0
          %465 = vmatpush1.msra.mxu0 %v343
          %466 = vmatprep.subr.mxu0 0.0
          %467 = vmatpush2.msra.mxu0 0.0
          %468 = vmatprep.subr.mxu0 0.0
          %469 = vmatpush2.msra.mxu0 0.0
          %470 = vmatprep.subr.mxu0 0.0
          %471 = vmatpush2.msra.mxu0 0.0
          %472 = vmatprep.subr.mxu0 0.0
          %473 = vmatpush2.msra.mxu0 0.0
          %474 = vmatprep.subr.mxu0 0.0
          %475 = vmatpush2.msra.mxu0 0.0
          %476 = vmatprep.subr.mxu0 0.0
          %477 = vmatpush2.msra.mxu0 0.0
          %478 = vmatprep.subr.mxu0 0.0
          %479 = vmatpush2.msra.mxu0 0.0
          %480 = vmatprep.subr.mxu0 0.0
          %481 = vmatpush2.msra.mxu0 0.0
          %482 = vmatprep.subr.mxu0 0.0
          %483 = vmatpush2.msra.mxu0 0.0
          %484 = vmatprep.subr.mxu0 0.0
          %485 = vmatpush2.msra.mxu0 0.0
          %486 = vmatprep.subr.mxu0 0.0
          %487 = vmatpush2.msra.mxu0 0.0
          %488 = vmatprep.subr.mxu0 0.0
          %489 = vmatpush2.msra.mxu0 0.0
          %490 = vmatprep.subr.mxu0 0.0
          %491 = vmatpush2.msra.mxu0 0.0
          %492 = vmatprep.subr.mxu0 0.0
          %493 = vmatpush2.msra.mxu0 0.0
          %494 = vmatprep.subr.mxu0 0.0
          %495 = vmatpush2.msra.mxu0 0.0
          %496 = vmatprep.subr.mxu0 0.0
          %497 = vmatpush2.msra.mxu0 0.0
          %498 = vmatprep.mubr.f32.mxu0 0.0
          %499 = vmatmul.mubr.f32.gmra.mxu0 %v429
          %v500 = vpop.f32.mrf.mxu0
          %v501 = vadd.f32 %v426, %v500
          %v502 = vpop.f32.mrf.mxu0
          %503 = vdwg.mxu0
          %s504 = scalar_lea.vmem %s2, 48
          %v505 = vld [vmem:[%s504] sm:$0xff]
          %v506 = vld [vmem:[%s504 + $0x8] sm:$0xff]
          %v507 = vld [vmem:[%s504 + $0x10] sm:$0x3]
          %v509 = vsel %vm352, %v340, 0
          %v512 = vsel %vm355, %v507, 0
          %514 = vmatprep.subr.mxu0 0.0
          %515 = vmatpush1.msra.mxu0 0.0
          %516 = vmatprep.subr.mxu0 0.0
          %517 = vmatpush1.msra.mxu0 0.0
          %518 = vmatprep.subr.mxu0 0.0
          %519 = vmatpush1.msra.mxu0 0.0
          %520 = vmatprep.subr.mxu0 0.0
          %521 = vmatpush1.msra.mxu0 0.0
          %522 = vmatprep.subr.mxu0 0.0
          %523 = vmatpush1.msra.mxu0 0.0
          %524 = vmatprep.subr.mxu0 0.0
          %525 = vmatpush1.msra.mxu0 0.0
          %526 = vmatprep.subr.mxu0 0.0
          %527 = vmatpush1.msra.mxu0 0.0
          %528 = vmatprep.subr.mxu0 0.0
          %529 = vmatpush1.msra.mxu0 0.0
          %530 = vmatprep.subr.mxu0 0.0
          %531 = vmatpush1.msra.mxu0 0.0
          %532 = vmatprep.subr.mxu0 0.0
          %533 = vmatpush1.msra.mxu0 0.0
          %534 = vmatprep.subr.mxu0 0.0
          %535 = vmatpush1.msra.mxu0 0.0
          %536 = vmatprep.subr.mxu0 0.0
          %537 = vmatpush1.msra.mxu0 0.0
          %538 = vmatprep.subr.mxu0 0.0
          %539 = vmatpush1.msra.mxu0 0.0
          %540 = vmatprep.subr.mxu0 0.0
          %541 = vmatpush1.msra.mxu0 %v512
          %542 = vmatprep.subr.mxu0 0.0
          %543 = vmatpush1.msra.mxu0 %v506
          %544 = vmatprep.subr.mxu0 0.0
          %545 = vmatpush1.msra.mxu0 %v505
          %546 = vmatprep.subr.mxu0 0.0
          %547 = vmatpush2.msra.mxu0 0.0
          %548 = vmatprep.subr.mxu0 0.0
          %549 = vmatpush2.msra.mxu0 0.0
          %550 = vmatprep.subr.mxu0 0.0
          %551 = vmatpush2.msra.mxu0 0.0
          %552 = vmatprep.subr.mxu0 0.0
          %553 = vmatpush2.msra.mxu0 0.0
          %554 = vmatprep.subr.mxu0 0.0
          %555 = vmatpush2.msra.mxu0 0.0
          %556 = vmatprep.subr.mxu0 0.0
          %557 = vmatpush2.msra.mxu0 0.0
          %558 = vmatprep.subr.mxu0 0.0
          %559 = vmatpush2.msra.mxu0 0.0
          %560 = vmatprep.subr.mxu0 0.0
          %561 = vmatpush2.msra.mxu0 0.0
          %562 = vmatprep.subr.mxu0 0.0
          %563 = vmatpush2.msra.mxu0 0.0
          %564 = vmatprep.subr.mxu0 0.0
          %565 = vmatpush2.msra.mxu0 0.0
          %566 = vmatprep.subr.mxu0 0.0
          %567 = vmatpush2.msra.mxu0 0.0
          %568 = vmatprep.subr.mxu0 0.0
          %569 = vmatpush2.msra.mxu0 0.0
          %570 = vmatprep.subr.mxu0 0.0
          %571 = vmatpush2.msra.mxu0 0.0
          %572 = vmatprep.subr.mxu0 0.0
          %573 = vmatpush2.msra.mxu0 0.0
          %574 = vmatprep.subr.mxu0 0.0
          %575 = vmatpush2.msra.mxu0 0.0
          %576 = vmatprep.subr.mxu0 0.0
          %577 = vmatpush2.msra.mxu0 0.0
          %578 = vmatprep.mubr.f32.mxu0 0.0
          %579 = vmatmul.mubr.f32.gmra.mxu0 %v509
          %v580 = vpop.f32.mrf.mxu0
          %v581 = vadd.f32 0.0, %v580
          %v582 = vpop.f32.mrf.mxu0
          %583 = vdwg.mxu0
          %v584 = vadd.f32 %v501, %v581
          %586 = vset.pattern.permute.xlu0 0
          %587 = vperm.xlu0 %586, %v221
          %v588 = vpop.permute.xlu0 %587
          %v590 = vadd.f32 %v584, %v588
          %s591 = smul.u32 %s197, 2
          %v594 = vunpack.c.l.s4 1966171168
          %v595 = vunpack.c.0.s8 %v594
          %v596 = vlaneseq
          %v597 = vshrl.u32 %v596, 7
          %v598 = vsub.s32 %v595, %v597
          %v599 = vrot.slane %v590, %v598
          %v600 = vcombine.high %v599, %v599
          %v602 = vunpack.c.l.s4 1966171168
          %v603 = vunpack.c.0.s8 %v602
          %v604 = vlaneseq
          %v605 = vshrl.u32 %v604, 7
          %v606 = vsub.s32 %v603, %v605
          %v607 = vrot.slane %v599, %v606
          %v609 = vunpack.c.l.s4 1966171168
          %v610 = vunpack.c.0.s8 %v609
          %v611 = vlaneseq
          %v612 = vshrl.u32 %v611, 7
          %v613 = vsub.s32 %v610, %v612
          %v614 = vrot.slane %v600, %v613
          %v615 = vcombine.high %v607, %v607
          %v616 = vcombine.high %v614, %v614
          %s621 = scalar_lea.vmem %s190, %s591 [#allocation2]
          %vm622 = vcmask 253952
          %623 = vst.msk [vmem:[%s621] sm:$0x1] %vm622, %v607
          %624 = vst.msk [vmem:[%s621 + $0x20] sm:$0x1] %vm622, %v614
          %625 = vst.msk [vmem:[%s621 + $0x40] sm:$0x1] %vm622, %v615
          %626 = vst.msk [vmem:[%s621 + $0x60] sm:$0x1] %vm622, %v616
          %v632 = vrot.slane %v216, 7
          %v633 = vsel %vm227, %v632, %v215
          %v634 = vrot.slane %v217, 6
          %v635 = vsel %vm230, %v634, %v633
          %v636 = vrot.slane %v218, 5
          %v637 = vsel %vm233, %v636, %v635
          %v638 = vsel %vm257, %v256, %v249
          %v639 = vsel %vm257, %v637, 0
          %641 = vmatprep.subr.mxu0 0.0
          %642 = vmatpush1.msra.mxu0 0.0
          %643 = vmatprep.subr.mxu0 0.0
          %644 = vmatpush1.msra.mxu0 0.0
          %645 = vmatprep.subr.mxu0 0.0
          %646 = vmatpush1.msra.mxu0 0.0
          %647 = vmatprep.subr.mxu0 0.0
          %648 = vmatpush1.msra.mxu0 0.0
          %649 = vmatprep.subr.mxu0 0.0
          %650 = vmatpush1.msra.mxu0 0.0
          %651 = vmatprep.subr.mxu0 0.0
          %652 = vmatpush1.msra.mxu0 0.0
          %653 = vmatprep.subr.mxu0 0.0
          %654 = vmatpush1.msra.mxu0 0.0
          %655 = vmatprep.subr.mxu0 0.0
          %656 = vmatpush1.msra.mxu0 0.0
          %657 = vmatprep.subr.mxu0 0.0
          %658 = vmatpush1.msra.mxu0 0.0
          %659 = vmatprep.subr.mxu0 0.0
          %660 = vmatpush1.msra.mxu0 0.0
          %661 = vmatprep.subr.mxu0 0.0
          %662 = vmatpush1.msra.mxu0 0.0
          %663 = vmatprep.subr.mxu0 0.0
          %664 = vmatpush1.msra.mxu0 0.0
          %665 = vmatprep.subr.mxu0 0.0
          %666 = vmatpush1.msra.mxu0 0.0
          %667 = vmatprep.subr.mxu0 0.0
          %668 = vmatpush1.msra.mxu0 0.0
          %669 = vmatprep.subr.mxu0 0.0
          %670 = vmatpush1.msra.mxu0 %v639
          %671 = vmatprep.subr.mxu0 0.0
          %672 = vmatpush1.msra.mxu0 %v638
          %673 = vmatprep.subr.mxu0 0.0
          %674 = vmatpush2.msra.mxu0 0.0
          %675 = vmatprep.subr.mxu0 0.0
          %676 = vmatpush2.msra.mxu0 0.0
          %677 = vmatprep.subr.mxu0 0.0
          %678 = vmatpush2.msra.mxu0 0.0
          %679 = vmatprep.subr.mxu0 0.0
          %680 = vmatpush2.msra.mxu0 0.0
          %681 = vmatprep.subr.mxu0 0.0
          %682 = vmatpush2.msra.mxu0 0.0
          %683 = vmatprep.subr.mxu0 0.0
          %684 = vmatpush2.msra.mxu0 0.0
          %685 = vmatprep.subr.mxu0 0.0
          %686 = vmatpush2.msra.mxu0 0.0
          %687 = vmatprep.subr.mxu0 0.0
          %688 = vmatpush2.msra.mxu0 0.0
          %689 = vmatprep.subr.mxu0 0.0
          %690 = vmatpush2.msra.mxu0 0.0
          %691 = vmatprep.subr.mxu0 0.0
          %692 = vmatpush2.msra.mxu0 0.0
          %693 = vmatprep.subr.mxu0 0.0
          %694 = vmatpush2.msra.mxu0 0.0
          %695 = vmatprep.subr.mxu0 0.0
          %696 = vmatpush2.msra.mxu0 0.0
          %697 = vmatprep.subr.mxu0 0.0
          %698 = vmatpush2.msra.mxu0 0.0
          %699 = vmatprep.subr.mxu0 0.0
          %700 = vmatpush2.msra.mxu0 0.0
          %701 = vmatprep.subr.mxu0 0.0
          %702 = vmatpush2.msra.mxu0 0.0
          %703 = vmatprep.subr.mxu0 0.0
          %704 = vmatpush2.msra.mxu0 0.0
          %705 = vmatprep.mubr.f32.mxu0 0.0
          %706 = vmatmul.mubr.f32.gmra.mxu0 %v261
          %v707 = vpop.f32.mrf.mxu0
          %v708 = vadd.f32 0.0, %v707
          %v709 = vpop.f32.mrf.mxu0
          %710 = vmatprep.mubr.f32.mxu0 0.0
          %711 = vmatmul.mubr.f32.gmra.mxu0 %v264
          %v712 = vpop.f32.mrf.mxu0
          %v713 = vadd.f32 0.0, %v712
          %v714 = vpop.f32.mrf.mxu0
          %715 = vdwg.mxu0
          %v716 = vld [vmem:[%s2] sm:$0xff]
          %v717 = vld [vmem:[%s2 + $0x8] sm:$0xff]
          %v718 = vld [vmem:[%s2 + $0x10] sm:$0x3]
          %v719 = vld [vmem:[%s346] sm:$0xff]
          %v720 = vld [vmem:[%s346 + $0x8] sm:$0xff]
          %v721 = vld [vmem:[%s346 + $0x10] sm:$0x3]
          %v723 = vrot.slane %v708, 4
          %v724 = vsel %vm352, %v723, 0
          %v727 = vsel %vm355, %v721, 0
          %729 = vmatprep.subr.mxu0 0.0
          %730 = vmatpush1.msra.mxu0 0.0
          %731 = vmatprep.subr.mxu0 0.0
          %732 = vmatpush1.msra.mxu0 0.0
          %733 = vmatprep.subr.mxu0 0.0
          %734 = vmatpush1.msra.mxu0 0.0
          %735 = vmatprep.subr.mxu0 0.0
          %736 = vmatpush1.msra.mxu0 0.0
          %737 = vmatprep.subr.mxu0 0.0
          %738 = vmatpush1.msra.mxu0 0.0
          %739 = vmatprep.subr.mxu0 0.0
          %740 = vmatpush1.msra.mxu0 0.0
          %741 = vmatprep.subr.mxu0 0.0
          %742 = vmatpush1.msra.mxu0 0.0
          %743 = vmatprep.subr.mxu0 0.0
          %744 = vmatpush1.msra.mxu0 0.0
          %745 = vmatprep.subr.mxu0 0.0
          %746 = vmatpush1.msra.mxu0 0.0
          %747 = vmatprep.subr.mxu0 0.0
          %748 = vmatpush1.msra.mxu0 0.0
          %749 = vmatprep.subr.mxu0 0.0
          %750 = vmatpush1.msra.mxu0 0.0
          %751 = vmatprep.subr.mxu0 0.0
          %752 = vmatpush1.msra.mxu0 0.0
          %753 = vmatprep.subr.mxu0 0.0
          %754 = vmatpush1.msra.mxu0 0.0
          %755 = vmatprep.subr.mxu0 0.0
          %756 = vmatpush1.msra.mxu0 %v727
          %757 = vmatprep.subr.mxu0 0.0
          %758 = vmatpush1.msra.mxu0 %v720
          %759 = vmatprep.subr.mxu0 0.0
          %760 = vmatpush1.msra.mxu0 %v719
          %761 = vmatprep.subr.mxu0 0.0
          %762 = vmatpush2.msra.mxu0 0.0
          %763 = vmatprep.subr.mxu0 0.0
          %764 = vmatpush2.msra.mxu0 0.0
          %765 = vmatprep.subr.mxu0 0.0
          %766 = vmatpush2.msra.mxu0 0.0
          %767 = vmatprep.subr.mxu0 0.0
          %768 = vmatpush2.msra.mxu0 0.0
          %769 = vmatprep.subr.mxu0 0.0
          %770 = vmatpush2.msra.mxu0 0.0
          %771 = vmatprep.subr.mxu0 0.0
          %772 = vmatpush2.msra.mxu0 0.0
          %773 = vmatprep.subr.mxu0 0.0
          %774 = vmatpush2.msra.mxu0 0.0
          %775 = vmatprep.subr.mxu0 0.0
          %776 = vmatpush2.msra.mxu0 0.0
          %777 = vmatprep.subr.mxu0 0.0
          %778 = vmatpush2.msra.mxu0 0.0
          %779 = vmatprep.subr.mxu0 0.0
          %780 = vmatpush2.msra.mxu0 0.0
          %781 = vmatprep.subr.mxu0 0.0
          %782 = vmatpush2.msra.mxu0 0.0
          %783 = vmatprep.subr.mxu0 0.0
          %784 = vmatpush2.msra.mxu0 0.0
          %785 = vmatprep.subr.mxu0 0.0
          %786 = vmatpush2.msra.mxu0 0.0
          %787 = vmatprep.subr.mxu0 0.0
          %788 = vmatpush2.msra.mxu0 0.0
          %789 = vmatprep.subr.mxu0 0.0
          %790 = vmatpush2.msra.mxu0 0.0
          %791 = vmatprep.subr.mxu0 0.0
          %792 = vmatpush2.msra.mxu0 0.0
          %793 = vmatprep.mubr.f32.mxu0 0.0
          %794 = vmatmul.mubr.f32.gmra.mxu0 %v724
          %v795 = vpop.f32.mrf.mxu0
          %v796 = vadd.f32 0.0, %v795
          %v797 = vpop.f32.mrf.mxu0
          %798 = vdwg.mxu0
          %v799 = vsel %vm352, %v708, 0
          %v802 = vsel %vm355, %v718, 0
          %804 = vmatprep.subr.mxu0 0.0
          %805 = vmatpush1.msra.mxu0 0.0
          %806 = vmatprep.subr.mxu0 0.0
          %807 = vmatpush1.msra.mxu0 0.0
          %808 = vmatprep.subr.mxu0 0.0
          %809 = vmatpush1.msra.mxu0 0.0
          %810 = vmatprep.subr.mxu0 0.0
          %811 = vmatpush1.msra.mxu0 0.0
          %812 = vmatprep.subr.mxu0 0.0
          %813 = vmatpush1.msra.mxu0 0.0
          %814 = vmatprep.subr.mxu0 0.0
          %815 = vmatpush1.msra.mxu0 0.0
          %816 = vmatprep.subr.mxu0 0.0
          %817 = vmatpush1.msra.mxu0 0.0
          %818 = vmatprep.subr.mxu0 0.0
          %819 = vmatpush1.msra.mxu0 0.0
          %820 = vmatprep.subr.mxu0 0.0
          %821 = vmatpush1.msra.mxu0 0.0
          %822 = vmatprep.subr.mxu0 0.0
          %823 = vmatpush1.msra.mxu0 0.0
          %824 = vmatprep.subr.mxu0 0.0
          %825 = vmatpush1.msra.mxu0 0.0
          %826 = vmatprep.subr.mxu0 0.0
          %827 = vmatpush1.msra.mxu0 0.0
          %828 = vmatprep.subr.mxu0 0.0
          %829 = vmatpush1.msra.mxu0 0.0
          %830 = vmatprep.subr.mxu0 0.0
          %831 = vmatpush1.msra.mxu0 %v802
          %832 = vmatprep.subr.mxu0 0.0
          %833 = vmatpush1.msra.mxu0 %v717
          %834 = vmatprep.subr.mxu0 0.0
          %835 = vmatpush1.msra.mxu0 %v716
          %836 = vmatprep.subr.mxu0 0.0
          %837 = vmatpush2.msra.mxu0 0.0
          %838 = vmatprep.subr.mxu0 0.0
          %839 = vmatpush2.msra.mxu0 0.0
          %840 = vmatprep.subr.mxu0 0.0
          %841 = vmatpush2.msra.mxu0 0.0
          %842 = vmatprep.subr.mxu0 0.0
          %843 = vmatpush2.msra.mxu0 0.0
          %844 = vmatprep.subr.mxu0 0.0
          %845 = vmatpush2.msra.mxu0 0.0
          %846 = vmatprep.subr.mxu0 0.0
          %847 = vmatpush2.msra.mxu0 0.0
          %848 = vmatprep.subr.mxu0 0.0
          %849 = vmatpush2.msra.mxu0 0.0
          %850 = vmatprep.subr.mxu0 0.0
          %851 = vmatpush2.msra.mxu0 0.0
          %852 = vmatprep.subr.mxu0 0.0
          %853 = vmatpush2.msra.mxu0 0.0
          %854 = vmatprep.subr.mxu0 0.0
          %855 = vmatpush2.msra.mxu0 0.0
          %856 = vmatprep.subr.mxu0 0.0
          %857 = vmatpush2.msra.mxu0 0.0
          %858 = vmatprep.subr.mxu0 0.0
          %859 = vmatpush2.msra.mxu0 0.0
          %860 = vmatprep.subr.mxu0 0.0
          %861 = vmatpush2.msra.mxu0 0.0
          %862 = vmatprep.subr.mxu0 0.0
          %863 = vmatpush2.msra.mxu0 0.0
          %864 = vmatprep.subr.mxu0 0.0
          %865 = vmatpush2.msra.mxu0 0.0
          %866 = vmatprep.subr.mxu0 0.0
          %867 = vmatpush2.msra.mxu0 0.0
          %868 = vmatprep.mubr.f32.mxu0 0.0
          %869 = vmatmul.mubr.f32.gmra.mxu0 %v799
          %v870 = vpop.f32.mrf.mxu0
          %v871 = vadd.f32 %v796, %v870
          %v872 = vpop.f32.mrf.mxu0
          %873 = vdwg.mxu0
          %v874 = vld [vmem:[%s504] sm:$0xff]
          %v875 = vld [vmem:[%s504 + $0x8] sm:$0xff]
          %v876 = vld [vmem:[%s504 + $0x10] sm:$0x3]
          %v878 = vsel %vm352, %v713, 0
          %v881 = vsel %vm355, %v876, 0
          %883 = vmatprep.subr.mxu0 0.0
          %884 = vmatpush1.msra.mxu0 0.0
          %885 = vmatprep.subr.mxu0 0.0
          %886 = vmatpush1.msra.mxu0 0.0
          %887 = vmatprep.subr.mxu0 0.0
          %888 = vmatpush1.msra.mxu0 0.0
          %889 = vmatprep.subr.mxu0 0.0
          %890 = vmatpush1.msra.mxu0 0.0
          %891 = vmatprep.subr.mxu0 0.0
          %892 = vmatpush1.msra.mxu0 0.0
          %893 = vmatprep.subr.mxu0 0.0
          %894 = vmatpush1.msra.mxu0 0.0
          %895 = vmatprep.subr.mxu0 0.0
          %896 = vmatpush1.msra.mxu0 0.0
          %897 = vmatprep.subr.mxu0 0.0
          %898 = vmatpush1.msra.mxu0 0.0
          %899 = vmatprep.subr.mxu0 0.0
          %900 = vmatpush1.msra.mxu0 0.0
          %901 = vmatprep.subr.mxu0 0.0
          %902 = vmatpush1.msra.mxu0 0.0
          %903 = vmatprep.subr.mxu0 0.0
          %904 = vmatpush1.msra.mxu0 0.0
          %905 = vmatprep.subr.mxu0 0.0
          %906 = vmatpush1.msra.mxu0 0.0
          %907 = vmatprep.subr.mxu0 0.0
          %908 = vmatpush1.msra.mxu0 0.0
          %909 = vmatprep.subr.mxu0 0.0
          %910 = vmatpush1.msra.mxu0 %v881
          %911 = vmatprep.subr.mxu0 0.0
          %912 = vmatpush1.msra.mxu0 %v875
          %913 = vmatprep.subr.mxu0 0.0
          %914 = vmatpush1.msra.mxu0 %v874
          %915 = vmatprep.subr.mxu0 0.0
          %916 = vmatpush2.msra.mxu0 0.0
          %917 = vmatprep.subr.mxu0 0.0
          %918 = vmatpush2.msra.mxu0 0.0
          %919 = vmatprep.subr.mxu0 0.0
          %920 = vmatpush2.msra.mxu0 0.0
          %921 = vmatprep.subr.mxu0 0.0
          %922 = vmatpush2.msra.mxu0 0.0
          %923 = vmatprep.subr.mxu0 0.0
          %924 = vmatpush2.msra.mxu0 0.0
          %925 = vmatprep.subr.mxu0 0.0
          %926 = vmatpush2.msra.mxu0 0.0
          %927 = vmatprep.subr.mxu0 0.0
          %928 = vmatpush2.msra.mxu0 0.0
          %929 = vmatprep.subr.mxu0 0.0
          %930 = vmatpush2.msra.mxu0 0.0
          %931 = vmatprep.subr.mxu0 0.0
          %932 = vmatpush2.msra.mxu0 0.0
          %933 = vmatprep.subr.mxu0 0.0
          %934 = vmatpush2.msra.mxu0 0.0
          %935 = vmatprep.subr.mxu0 0.0
          %936 = vmatpush2.msra.mxu0 0.0
          %937 = vmatprep.subr.mxu0 0.0
          %938 = vmatpush2.msra.mxu0 0.0
          %939 = vmatprep.subr.mxu0 0.0
          %940 = vmatpush2.msra.mxu0 0.0
          %941 = vmatprep.subr.mxu0 0.0
          %942 = vmatpush2.msra.mxu0 0.0
          %943 = vmatprep.subr.mxu0 0.0
          %944 = vmatpush2.msra.mxu0 0.0
          %945 = vmatprep.subr.mxu0 0.0
          %946 = vmatpush2.msra.mxu0 0.0
          %947 = vmatprep.mubr.f32.mxu0 0.0
          %948 = vmatmul.mubr.f32.gmra.mxu0 %v878
          %v949 = vpop.f32.mrf.mxu0
          %v950 = vadd.f32 0.0, %v949
          %v951 = vpop.f32.mrf.mxu0
          %952 = vdwg.mxu0
          %v953 = vadd.f32 %v871, %v950
          %v954 = vadd.f32 %v953, %v588
          %s955 = sadd.s32 %s591, 1
          %v958 = vunpack.c.l.s4 1966171168
          %v959 = vunpack.c.0.s8 %v958
          %v960 = vlaneseq
          %v961 = vshrl.u32 %v960, 7
          %v962 = vsub.s32 %v959, %v961
          %v963 = vrot.slane %v954, %v962
          %v964 = vcombine.high %v963, %v963
          %v966 = vunpack.c.l.s4 1966171168
          %v967 = vunpack.c.0.s8 %v966
          %v968 = vlaneseq
          %v969 = vshrl.u32 %v968, 7
          %v970 = vsub.s32 %v967, %v969
          %v971 = vrot.slane %v963, %v970
          %v973 = vunpack.c.l.s4 1966171168
          %v974 = vunpack.c.0.s8 %v973
          %v975 = vlaneseq
          %v976 = vshrl.u32 %v975, 7
          %v977 = vsub.s32 %v974, %v976
          %v978 = vrot.slane %v964, %v977
          %v979 = vcombine.high %v971, %v971
          %v980 = vcombine.high %v978, %v978
          %s985 = scalar_lea.vmem %s190, %s955 [#allocation2]
          %986 = vst.msk [vmem:[%s985] sm:$0x1] %vm622, %v971
          %987 = vst.msk [vmem:[%s985 + $0x20] sm:$0x1] %vm622, %v978
          %988 = vst.msk [vmem:[%s985 + $0x40] sm:$0x1] %vm622, %v979
          %989 = vst.msk [vmem:[%s985 + $0x60] sm:$0x1] %vm622, %v980
        $region41: #{tpu_custom_call.1} parent=35 // loop_footer
          %s201 = sadd.s32 1, %s197
        $region42: #{tpu_custom_call.1} parent=35 // loop_footer_branch
          %196 = sbr.rel target = $region38
        $region43: #{tpu_custom_call.1} parent=35 // loop_exit
          _
        %s990 = sand.u32 %s115, 1
        %s991 = scalar_lea.sflag [#allocation3], %s990
        %s992 = sand.u32 %s115, 1
        %s993 = smul.addr %s992, 128
        %s994 = scalar_lea.vmem [#allocation2], %s993
        // Predicated region
        $region44: #{tpu_custom_call.1} parent=35 // pred_check
          %p995 = pneg %p125
        $region45: #{tpu_custom_call.1} parent=35 // pred_check_branch
          %997 = sbr.rel (%p995) target = $region47
        $region46: #{tpu_custom_call.1} parent=35 // pred_region
          %s999 = ssub.s32 2048, 2048
          %1000 = vsyncadd %s991, %s999
          %s1001 = smul.addr %s18, 16
          %s1002 = smul.addr %s1001, 128
          %s1003 = scalar_lea.hbm %s4, %s1002
          %s1004 = sshll.u32 %s994, 4
          %s1005 = int_to_ptr.vmem [resolvable:$true] %s1004
          %1010 = dma.vmem_to_hbm [thread:$0]  %s1005, 2048, %s1003, %s991, 128, 128, 8
        $region47: #{tpu_custom_call.1} parent=35 // pred_fallthru
          _
      $region36: #{tpu_custom_call.1} parent=5 // pred_fallthru
        _
      %p1011 = scmp.le.s32.totalorder 2, %s13
      // Predicated region
      $region48: #{tpu_custom_call.1} parent=5 // pred_check
        %p1012 = pneg %p1011
      $region49: #{tpu_custom_call.1} parent=5 // pred_check_branch
        %1014 = sbr.rel (%p1012) target = $region51
      $region50: #{tpu_custom_call.1} parent=5 // pred_region
        %s1015 = ssub.s32 %s13, 2
        // Predicated region
        $region52: #{tpu_custom_call.1} parent=50 // pred_check
          %p1016 = pneg %p131
        $region53: #{tpu_custom_call.1} parent=50 // pred_check_branch
          %1018 = sbr.rel (%p1016) target = $region55
        $region54: #{tpu_custom_call.1} parent=50 // pred_region
          %s1019 = sand.u32 %s116, 1
          %s1020 = scalar_lea.sflag [#allocation3], %s1019
          %s1021 = sand.u32 %s116, 1
          %s1022 = smul.addr %s1021, 128
          %s1023 = scalar_lea.vmem [#allocation2], %s1022
          %1024 = dma.done %s1020, 2048
        $region55: #{tpu_custom_call.1} parent=50 // pred_fallthru
          _
      $region51: #{tpu_custom_call.1} parent=5 // pred_fallthru
        _
    $region6: #{tpu_custom_call.1} parent=1 // loop_footer
      %s17 = sadd.s32 1, %s13
    $region7: #{tpu_custom_call.1} parent=1 // loop_footer_branch
      %12 = sbr.rel target = $region3
    $region8: #{tpu_custom_call.1} parent=1 // loop_exit
      _
    %1025 = vsyncpa [#allocation3], 1
    %s1026 = scalar_lea.sflag [#allocation3], 1
    %1027 = vsyncpa %s1026, 1

</llo_original>
